<compile_context>
chip_gen: v7x
topology: tpu7x:2x2x1
jax: 0.10.0
libtpu: 0.0.40
codegen_flags: <defaults>
</compile_context>

<pallas_src>
import math

import jax
import jax.numpy as jnp
from jax import lax
from jax.experimental import pallas as pl
from jax.experimental.pallas import tpu as pltpu

_LANES = 128
_SUBLANES = 8


def _cdiv(a, b):
    return -(-a // b)


def _round_up(x, m):
    return ((x + m - 1) // m) * m


def _has_two_tensorcores():
    # The leading "parallel" grid axis only pays off on 2-TensorCore chips
    # (v7x); v5e/v6e are single-TC, so default to a single slice there.
    try:
        kind = jax.devices()[0].device_kind.lower()
    except Exception:
        return False
    return "v7" in kind


def _choose_layout(total, max_block_elems):
    """Pick a lane/sublane-dense (rows, cols) layout and a row-block size.

    Returns (cols, rows, block_rows, padded_total).  padded_total == total on
    the zero-copy path (pure reshape); padded_total > total only on the rare
    fallback path for ragged element counts.
    """
    for cols in (1024, 512, 256, 128):
        if total % cols:
            continue
        rows = total // cols
        if total <= max_block_elems:
            return cols, rows, rows, total           # single full-array block
        desired = max(_SUBLANES, (max_block_elems // cols) // _SUBLANES * _SUBLANES)
        b = min(desired, rows // _SUBLANES * _SUBLANES)
        while b >= _SUBLANES:
            if rows % b == 0:
                return cols, rows, b, total
            b -= _SUBLANES
    # Fallback (ragged total): pad with (pred=1, target=1) sentinels, which
    # contribute exactly 0 loss.  Costs one copy of each input; rare shapes only.
    cols = 1024
    desired = max(_SUBLANES, (max_block_elems // cols) // _SUBLANES * _SUBLANES)
    rows_needed = _cdiv(total, cols)
    if rows_needed <= desired:
        rows = rows_needed
        block_rows = rows
    else:
        rows = _round_up(rows_needed, desired)
        block_rows = desired
    return cols, rows, block_rows, rows * cols


def _bce_kernel(pred_ref, targ_ref, out_ref, acc_ref):
    """Accumulates sum of log(1-p) + t*(log p - log(1-p))  (== -BCE per element)."""
    block_rows, cols = pred_ref.shape
    slice_rows = acc_ref.shape[0]
    n_full = block_rows // slice_rows
    rem = block_rows - n_full * slice_rows

    k = pl.program_id(1)

    @pl.when(k == 0)
    def _():
        acc_ref[...] = jnp.zeros(acc_ref.shape, acc_ref.dtype)

    def neg_loss(p, t):
        p = p.astype(jnp.float32)
        t = t.astype(jnp.float32)
        # PyTorch nn.BCELoss clamps the log terms at -100.
        log_p = jnp.maximum(jnp.log(p), -100.0)
        log_1mp = jnp.maximum(jnp.log(1.0 - p), -100.0)
        # == -(t*log_p + (1-t)*log_1mp); negate + /N once in the wrapper.
        return log_1mp + t * (log_p - log_1mp)

    if n_full == 1 and rem == 0:
        # Block is a single slice (small inputs): one shot.
        acc_ref[...] += neg_loss(pred_ref[...], targ_ref[...])
    else:
        def body(r, carry):
            i = pl.multiple_of(r * slice_rows, slice_rows)
            return carry + neg_loss(pred_ref[pl.ds(i, slice_rows), :],
                                    targ_ref[pl.ds(i, slice_rows), :])

        part = lax.fori_loop(0, n_full, body,
                             jnp.zeros((slice_rows, cols), jnp.float32),
                             unroll=min(8, n_full))
        acc_ref[...] += part
        if rem:
            start = n_full * slice_rows
            acc_ref[0:rem, :] += neg_loss(pred_ref[pl.ds(start, rem), :],
                                          targ_ref[pl.ds(start, rem), :])

    @pl.when(k == pl.num_programs(1) - 1)
    def _():
        # Single cross-lane/sublane reduce per parallel slice; broadcast into a
        # lane-dense (8,128) output block (layout-legal, unmasked stores).
        out_ref[...] = jnp.broadcast_to(jnp.sum(acc_ref[...]), out_ref.shape)


def bce_loss(pred, target, *, max_block_bytes=4 * 1024 * 1024):
    """Equivalent of BCELoss.forward: mean BCE over pred.view(B, -1)."""
    assert pred.shape == target.shape

    total = int(math.prod(pred.shape))
    itemsize = pred.dtype.itemsize
    max_block_elems = max(_SUBLANES * _LANES, max_block_bytes // itemsize)

    cols, rows, block_rows, padded_total = _choose_layout(total, max_block_elems)

    # Flatten (row-major, same ordering as pred.view(B, -1)); native dtype is
    # streamed and cast to f32 inside the kernel.
    pred_flat = pred.reshape(-1)
    targ_flat = target.reshape(-1)
    pad = padded_total - total
    if pad:
        # Rare fallback only: sentinel (pred=1, target=1) contributes 0 loss.
        pred_flat = jnp.pad(pred_flat, (0, pad), constant_values=1)
        targ_flat = jnp.pad(targ_flat, (0, pad), constant_values=1)

    pred_2d = pred_flat.reshape(rows, cols)
    targ_2d = targ_flat.reshape(rows, cols)

    num_blocks = rows // block_rows
    num_parallel = 2 if (num_blocks >= 2 and num_blocks % 2 == 0
                         and _has_two_tensorcores()) else 1
    kblocks = num_blocks // num_parallel

    slice_rows = _SUBLANES if block_rows >= _SUBLANES else block_rows

    block_bytes = block_rows * cols * itemsize
    acc_bytes = slice_rows * cols * 4
    vmem_limit = int(max(32 * 1024 * 1024, 4 * block_bytes + 2 * acc_bytes + (1 << 20)))

    partials = pl.pallas_call(
        _bce_kernel,
        out_shape=jax.ShapeDtypeStruct((num_parallel, _SUBLANES, _LANES), jnp.float32),
        grid_spec=pltpu.PrefetchScalarGridSpec(
            num_scalar_prefetch=0,
            grid=(num_parallel, kblocks),
            in_specs=[
                pl.BlockSpec((block_rows, cols), lambda i, k: (i * kblocks + k, 0)),
                pl.BlockSpec((block_rows, cols), lambda i, k: (i * kblocks + k, 0)),
            ],
            out_specs=pl.BlockSpec((1, _SUBLANES, _LANES), lambda i, k: (i, 0, 0)),
            scratch_shapes=[pltpu.VMEM((slice_rows, cols), jnp.float32)],
        ),
        compiler_params=pltpu.CompilerParams(
            dimension_semantics=("parallel", "arbitrary"),
            vmem_limit_bytes=vmem_limit,
        ),
    )(pred_2d, targ_2d)

    # Mean reduction (size_average=True, weight=None) over the ORIGINAL count;
    # apply the single negation here.
    return -jnp.sum(partials[:, 0, 0]) / jnp.float32(total)


def _reference_bce(pred, target):
    p = pred.astype(jnp.float32)
    t = target.astype(jnp.float32)
    log_p = jnp.maximum(jnp.log(p), -100.0)
    log_1mp = jnp.maximum(jnp.log(1.0 - p), -100.0)
    return jnp.mean(-(t * log_p + (1.0 - t) * log_1mp))


if __name__ == "__main__":
    key = jax.random.PRNGKey(0)

    def make(shape, k):
        k1, k2 = jax.random.split(k)
        # pred must be in (0, 1): nn.BCELoss expects probabilities.
        p = jax.nn.sigmoid(jax.random.normal(k1, shape, dtype=jnp.float32))
        t = (jax.random.uniform(k2, shape) > 0.5).astype(jnp.float32)
        return p, t

    k0, k1, k2 = jax.random.split(key, 3)

    # Primary shape consistent with the module's NCHW usage.
    pred, target = make((2, 4, 16, 16), k0)
    loss = jax.block_until_ready(bce_loss(pred, target))
    ref = _reference_bce(pred, target)
    assert jnp.allclose(loss, ref, rtol=1e-5, atol=1e-5), (loss, ref)

    # Exercise the multi-slice inner fold and the multi-block reduction grid
    # (small max_block_bytes forces >1 grid step).
    pred2, target2 = make((4, 8, 32, 32), k1)
    loss2 = jax.block_until_ready(bce_loss(pred2, target2, max_block_bytes=64 * 1024))
    ref2 = _reference_bce(pred2, target2)
    assert jnp.allclose(loss2, ref2, rtol=1e-5, atol=1e-5), (loss2, ref2)

    # Exercise the ragged-total fallback (sentinel padding path).
    pred3, target3 = make((2, 3, 5, 7), k2)
    loss3 = jax.block_until_ready(bce_loss(pred3, target3))
    ref3 = _reference_bce(pred3, target3)
    assert jnp.allclose(loss3, ref3, rtol=1e-5, atol=1e-5), (loss3, ref3)

    print("KERNEL_OK")
</pallas_src>

<mosaic_0001>
module attributes {stable_mosaic.version = 11 : i64} {
  func.func @_bce_kernel(%arg0: i32, %arg1: i32, %arg2: memref<2x1024xf32, #tpu.memory_space<vmem>>, %arg3: memref<2x1024xf32, #tpu.memory_space<vmem>>, %arg4: memref<1x8x128xf32, #tpu.memory_space<vmem>>, %arg5: memref<2x1024xf32, #tpu.memory_space<vmem>>) attributes {dimension_semantics = [#tpu.dimension_semantics<parallel>, #tpu.dimension_semantics<arbitrary>], iteration_bounds = array<i64: 1, 1>, scalar_prefetch = 0 : i64, scratch_operands = 1 : i64, tpu.core_type = #tpu.core_type<tc>, window_params = [{transform_indices = @transform_0, window_bounds = array<i64: 2, 1024>}, {transform_indices = @transform_1, window_bounds = array<i64: 2, 1024>}, {transform_indices = @transform_2, window_bounds = array<i64: 1, 8, 128>}]} {
    %c0_i32 = arith.constant 0 : i32
    %0 = arith.cmpi eq, %arg1, %c0_i32 : i32
    %1 = arith.extui %0 : i1 to i32
    %c0_i32_0 = arith.constant 0 : i32
    %2 = arith.cmpi ne, %1, %c0_i32_0 : i32
    scf.if %2 {
      %cst_12 = arith.constant 0.000000e+00 : f32
      %22 = vector.broadcast %cst_12 : f32 to vector<2x1024xf32>
      %c0_13 = arith.constant 0 : index
      %c0_14 = arith.constant 0 : index
      %23 = vector.load %arg5[%c0_13, %c0_14] : memref<2x1024xf32, #tpu.memory_space<vmem>>, vector<2x1024xf32>
      tpu.vector_store %arg5[%c0_13, %c0_14], %22 {strides = array<i32>} : memref<2x1024xf32, #tpu.memory_space<vmem>>, vector<2x1024xf32>,
    } else {
    }
    %c0 = arith.constant 0 : index
    %c0_1 = arith.constant 0 : index
    %3 = vector.load %arg5[%c0, %c0_1] : memref<2x1024xf32, #tpu.memory_space<vmem>>, vector<2x1024xf32>
    %c0_2 = arith.constant 0 : index
    %c0_3 = arith.constant 0 : index
    %4 = vector.load %arg2[%c0_2, %c0_3] : memref<2x1024xf32, #tpu.memory_space<vmem>>, vector<2x1024xf32>
    %c0_4 = arith.constant 0 : index
    %c0_5 = arith.constant 0 : index
    %5 = vector.load %arg3[%c0_4, %c0_5] : memref<2x1024xf32, #tpu.memory_space<vmem>>, vector<2x1024xf32>
    %6 = math.log %4 : vector<2x1024xf32>
    %cst = arith.constant -1.000000e+02 : f32
    %7 = vector.broadcast %cst : f32 to vector<2x1024xf32>
    %8 = arith.maximumf %6, %7 : vector<2x1024xf32>
    %cst_6 = arith.constant 1.000000e+00 : f32
    %9 = vector.broadcast %cst_6 : f32 to vector<2x1024xf32>
    %10 = arith.subf %9, %4 : vector<2x1024xf32>
    %11 = math.log %10 : vector<2x1024xf32>
    %cst_7 = arith.constant -1.000000e+02 : f32
    %12 = vector.broadcast %cst_7 : f32 to vector<2x1024xf32>
    %13 = arith.maximumf %11, %12 : vector<2x1024xf32>
    %14 = arith.subf %8, %13 : vector<2x1024xf32>
    %15 = arith.mulf %5, %14 : vector<2x1024xf32>
    %16 = arith.addf %13, %15 : vector<2x1024xf32>
    %17 = arith.addf %3, %16 : vector<2x1024xf32>
    %c0_8 = arith.constant 0 : index
    %c0_9 = arith.constant 0 : index
    %18 = vector.load %arg5[%c0_8, %c0_9] : memref<2x1024xf32, #tpu.memory_space<vmem>>, vector<2x1024xf32>
    tpu.vector_store %arg5[%c0_8, %c0_9], %17 {strides = array<i32>} : memref<2x1024xf32, #tpu.memory_space<vmem>>, vector<2x1024xf32>,
    %c0_i32_10 = arith.constant 0 : i32
    %19 = arith.cmpi eq, %arg1, %c0_i32_10 : i32
    %20 = arith.extui %19 : i1 to i32
    %c0_i32_11 = arith.constant 0 : i32
    %21 = arith.cmpi ne, %20, %c0_i32_11 : i32
    scf.if %21 {
      %c0_12 = arith.constant 0 : index
      %c0_13 = arith.constant 0 : index
      %22 = vector.load %arg5[%c0_12, %c0_13] : memref<2x1024xf32, #tpu.memory_space<vmem>>, vector<2x1024xf32>
      %23 = vector.shape_cast %22 : vector<2x1024xf32> to vector<1x2x1024xf32>
      %cst_14 = arith.constant dense<0.000000e+00> : vector<1xf32>
      %24 = vector.multi_reduction <add>, %23, %cst_14 [1, 2] : vector<1x2x1024xf32> to vector<1xf32>
      %25 = vector.shape_cast %24 : vector<1xf32> to vector<1x1x1xf32>
      %26 = vector.extract %25[0, 0, 0] : f32 from vector<1x1x1xf32>
      %27 = vector.broadcast %26 : f32 to vector<1x8x128xf32>
      %c0_15 = arith.constant 0 : index
      %c0_16 = arith.constant 0 : index
      %c0_17 = arith.constant 0 : index
      %28 = vector.load %arg4[%c0_15, %c0_16, %c0_17] : memref<1x8x128xf32, #tpu.memory_space<vmem>>, vector<1x8x128xf32>
      tpu.vector_store %arg4[%c0_15, %c0_16, %c0_17], %27 {strides = array<i32>} : memref<1x8x128xf32, #tpu.memory_space<vmem>>, vector<1x8x128xf32>,
    } else {
    }
    return
  }
  func.func @transform_0(%arg0: i32, %arg1: i32) -> (i32, i32) {
    %c1_i32 = arith.constant 1 : i32
    %0 = arith.muli %arg0, %c1_i32 : i32
    %1 = arith.addi %0, %arg1 : i32
    %c0_i32 = arith.constant 0 : i32
    %c0_i32_0 = arith.constant 0 : i32
    return %1, %c0_i32 : i32, i32
  }
  func.func @transform_1(%arg0: i32, %arg1: i32) -> (i32, i32) {
    %c1_i32 = arith.constant 1 : i32
    %0 = arith.muli %arg0, %c1_i32 : i32
    %1 = arith.addi %0, %arg1 : i32
    %c0_i32 = arith.constant 0 : i32
    %c0_i32_0 = arith.constant 0 : i32
    return %1, %c0_i32 : i32, i32
  }
  func.func @transform_2(%arg0: i32, %arg1: i32) -> (i32, i32, i32) {
    %c0_i32 = arith.constant 0 : i32
    %c0_i32_0 = arith.constant 0 : i32
    %c0_i32_1 = arith.constant 0 : i32
    return %arg0, %c0_i32, %c0_i32_0 : i32, i32, i32
  }
}

</mosaic_0001>

<llo_original>
// kernel: tpu_custom_call.1
$region0: #{tpu_custom_call.1}
  #allocation0 [shape = 'u32[]', space=smem, size = 0x4, offset = 0x4, fixed_abs, tag = 'smem constant byte address 0x4 - core index']
  #allocation1 [shape = 'u32[144,128]{1,0:T(1,128)}', space=vmem, size = 0x12000, scoped, tag = 'internal scratch']
  #allocation2 [shape = 'f32[2,1024]{1,0:T(2,128)}', space=vmem, size = 0x2000, scoped, tag = 'scratch operand']
  %s0 = inlined_call_operand.hbm [shape: f32[2,1024], index: 0, kind: input, shape index: {}]
  %s1 = inlined_call_operand.hbm [shape: f32[2,1024], index: 1, kind: input, shape index: {}]
  %s2 = inlined_call_operand.hbm [shape: f32[1,8,128], index: 2, kind: output, shape index: {}]
  %s3 = sld [smem:[#allocation0]]
  $region34: #{tpu_custom_call.1} parent=0
    _
  %s5 = ssub.s32 1, %s3
  %s6 = scalar_select 0, %s5, %s3
  $region1: #{tpu_custom_call.1} parent=0
    #allocation3 [shape = 'u8[8192]{0}', space=vmem, size = 0x2000, scoped, tag = 'input window, operand 0, single buffered']
    #allocation4 [shape = 's32[1]{0}', space=sflag, size = 0x4, scoped, tag = 'scoped memory for tpu_custom_call.1']
    #allocation5 [shape = 's32[1]{0}', space=sflag, size = 0x4, scoped, tag = 'scoped memory for tpu_custom_call.1']
    #allocation6 [shape = 'u8[8192]{0}', space=vmem, size = 0x2000, scoped, tag = 'input window, operand 1, single buffered']
    #allocation7 [shape = 's32[1]{0}', space=sflag, size = 0x4, scoped, tag = 'scoped memory for tpu_custom_call.1']
    #allocation8 [shape = 'u8[4096]{0}', space=vmem, size = 0x1000, scoped, tag = 'output window, operand 0, single buffered']
    %7 = vsyncpa [#allocation4], 0
    %8 = vsyncpa [#allocation7], 0
    %9 = vsyncpa [#allocation5], 0
    // Predicated region
    $region2: #{tpu_custom_call.1} parent=1 // pred_check
      _
    $region3: #{tpu_custom_call.1} parent=1 // pred_check_branch
      %11 = sbr.rel (0) target = $region5
    $region4: #{tpu_custom_call.1} parent=1 // pred_region
      %s12 = sadd.s32 0, 0
      %s14 = ssub.s32 256, 256
      %15 = vsyncadd [#allocation4], %s14
      %s16 = smul.addr %s12, 8
      %s17 = smul.addr %s16, 32
      %s18 = scalar_lea.hbm %s0, %s17
      %s20 = sshll.u32 [#allocation3], 4
      %s21 = int_to_ptr.vmem [resolvable:$true] %s20
      %23 = dma.hbm_to_vmem [thread:$0]  %s18, 256, %s21, [#allocation4]
    $region5: #{tpu_custom_call.1} parent=1 // pred_fallthru
      _
    // Predicated region
    $region6: #{tpu_custom_call.1} parent=1 // pred_check
      _
    $region7: #{tpu_custom_call.1} parent=1 // pred_check_branch
      %25 = sbr.rel (0) target = $region9
    $region8: #{tpu_custom_call.1} parent=1 // pred_region
      %s26 = sadd.s32 0, 0
      %s28 = ssub.s32 256, 256
      %29 = vsyncadd [#allocation7], %s28
      %s30 = smul.addr %s26, 8
      %s31 = smul.addr %s30, 32
      %s32 = scalar_lea.hbm %s1, %s31
      %s34 = sshll.u32 [#allocation6], 4
      %s35 = int_to_ptr.vmem [resolvable:$true] %s34
      %37 = dma.hbm_to_vmem [thread:$0]  %s32, 256, %s35, [#allocation7]
    $region9: #{tpu_custom_call.1} parent=1 // pred_fallthru
      _
    // Predicated region
    $region10: #{tpu_custom_call.1} parent=1 // pred_check
      _
    $region11: #{tpu_custom_call.1} parent=1 // pred_check_branch
      %39 = sbr.rel (0) target = $region13
    $region12: #{tpu_custom_call.1} parent=1 // pred_region
      %40 = dma.done [#allocation4], 256
    $region13: #{tpu_custom_call.1} parent=1 // pred_fallthru
      _
    // Predicated region
    $region14: #{tpu_custom_call.1} parent=1 // pred_check
      _
    $region15: #{tpu_custom_call.1} parent=1 // pred_check_branch
      %42 = sbr.rel (0) target = $region17
    $region16: #{tpu_custom_call.1} parent=1 // pred_region
      %43 = dma.done [#allocation7], 256
    $region17: #{tpu_custom_call.1} parent=1 // pred_fallthru
      _
    %s44 = sadd.s32 0, 0
    %s45 = sadd.s32 0, 0
    %p46 = scmp.eq.s32.totalorder 0, 0
    // Predicated region
    $region18: #{tpu_custom_call.1} parent=1 // pred_check
      %p47 = pneg %p46
    $region19: #{tpu_custom_call.1} parent=1 // pred_check_branch
      %49 = sbr.rel (%p47) target = $region21
    $region20: #{tpu_custom_call.1} parent=1 // pred_region
      %50 = vst [vmem:[#allocation2] sm:$0xff] 0.0
      %51 = vst [vmem:[#allocation2 + $0x8] sm:$0xff] 0.0
    $region21: #{tpu_custom_call.1} parent=1 // pred_fallthru
      _
    %v52 = vld [vmem:[#allocation2] sm:$0xff]
    %v53 = vld [vmem:[#allocation2 + $0x8] sm:$0xff]
    %v54 = vld [vmem:[#allocation3] sm:$0xff]
    %v55 = vld [vmem:[#allocation3 + $0x8] sm:$0xff]
    %v56 = vld [vmem:[#allocation6] sm:$0xff]
    %v57 = vld [vmem:[#allocation6 + $0x8] sm:$0xff]
    %v58 = vlog2.pop %v54
    %v59 = vmul.f32 %v58, 0.6931472
    %v60 = vlog2.pop %v55
    %v61 = vmul.f32 %v60, 0.6931472
    %v62 = vmax.f32 %v59, -100.0
    %v63 = vmax.f32 %v61, -100.0
    %v64 = vsub.f32 1.0, %v54
    %v65 = vsub.f32 1.0, %v55
    %v66 = vlog2.pop %v64
    %v67 = vmul.f32 %v66, 0.6931472
    %v68 = vlog2.pop %v65
    %v69 = vmul.f32 %v68, 0.6931472
    %v70 = vmax.f32 %v67, -100.0
    %v71 = vmax.f32 %v69, -100.0
    %v72 = vsub.f32 %v62, %v70
    %v73 = vsub.f32 %v63, %v71
    %v74 = vmul.f32 %v56, %v72
    %v75 = vmul.f32 %v57, %v73
    %v76 = vadd.f32 %v70, %v74
    %v77 = vadd.f32 %v71, %v75
    %v78 = vadd.f32 %v52, %v76
    %v79 = vadd.f32 %v53, %v77
    %80 = vst [vmem:[#allocation2] sm:$0xff] %v78
    %81 = vst [vmem:[#allocation2 + $0x8] sm:$0xff] %v79
    // Predicated region
    $region22: #{tpu_custom_call.1} parent=1 // pred_check
      %p82 = pneg %p46
    $region23: #{tpu_custom_call.1} parent=1 // pred_check_branch
      %84 = sbr.rel (%p82) target = $region25
    $region24: #{tpu_custom_call.1} parent=1 // pred_region
      %v85 = vld [vmem:[#allocation2] sm:$0xff]
      %v86 = vld [vmem:[#allocation2 + $0x8] sm:$0xff]
      %v89 = vcombine.high %v85, %v85
      %v91 = vunpack.c.l.s4 1983009808
      %v92 = vunpack.c.0.s8 %v91
      %v93 = vlaneseq
      %v94 = vshrl.u32 %v93, 7
      %v95 = vsub.s32 %v92, %v94
      %v96 = vrot.slane %v85, %v95
      %v98 = vunpack.c.l.s4 1983009808
      %v99 = vunpack.c.0.s8 %v98
      %v100 = vlaneseq
      %v101 = vshrl.u32 %v100, 7
      %v102 = vsub.s32 %v99, %v101
      %v103 = vrot.slane %v89, %v102
      %v104 = vcombine.high %v96, %v96
      %v105 = vcombine.high %v103, %v103
      %v106 = vcombine.high %v86, %v86
      %v108 = vunpack.c.l.s4 1983009808
      %v109 = vunpack.c.0.s8 %v108
      %v110 = vlaneseq
      %v111 = vshrl.u32 %v110, 7
      %v112 = vsub.s32 %v109, %v111
      %v113 = vrot.slane %v86, %v112
      %v115 = vunpack.c.l.s4 1983009808
      %v116 = vunpack.c.0.s8 %v115
      %v117 = vlaneseq
      %v118 = vshrl.u32 %v117, 7
      %v119 = vsub.s32 %v116, %v118
      %v120 = vrot.slane %v106, %v119
      %v121 = vcombine.high %v113, %v113
      %v122 = vcombine.high %v120, %v120
      %vm131 = vcmask 1041408
      %v132 = vsel %vm131, %v96, 0.0
      %v133 = vsel %vm131, %v104, 0.0
      %v134 = vadd.f32 %v132, %v133
      %v135 = vsel %vm131, %v103, 0.0
      %v136 = vadd.f32 %v134, %v135
      %v137 = vsel %vm131, %v105, 0.0
      %v138 = vadd.f32 %v136, %v137
      %v139 = vsel %vm131, %v113, 0.0
      %v140 = vadd.f32 %v138, %v139
      %v141 = vsel %vm131, %v121, 0.0
      %v142 = vadd.f32 %v140, %v141
      %v143 = vsel %vm131, %v120, 0.0
      %v144 = vadd.f32 %v142, %v143
      %v145 = vsel %vm131, %v122, 0.0
      %v146 = vadd.f32 %v144, %v145
      %147 = vadd.xlane.f32.xlu0 %v146
      %v148 = vpop.xlane.xlu0 %147
      %v149 = vrot.slane %v148, 4
      %v150 = vadd.f32 %v148, %v149
      %v151 = vrot.slane %v150, 2
      %v152 = vadd.f32 %v150, %v151
      %v153 = vrot.slane %v152, 1
      %v154 = vadd.f32 %v152, %v153
      %s155 = vtos %v154
      %v156 = vstv %s155
      %157 = vst [vmem:[#allocation8] sm:$0xff] %v156
    $region25: #{tpu_custom_call.1} parent=1 // pred_fallthru
      _
    // Predicated region
    $region26: #{tpu_custom_call.1} parent=1 // pred_check
      _
    $region27: #{tpu_custom_call.1} parent=1 // pred_check_branch
      %159 = sbr.rel (0) target = $region29
    $region28: #{tpu_custom_call.1} parent=1 // pred_region
      %s161 = ssub.s32 128, 128
      %162 = vsyncadd [#allocation5], %s161
      %s164 = sshll.u32 [#allocation8], 4
      %s165 = int_to_ptr.vmem [resolvable:$true] %s164
      %167 = dma.vmem_to_hbm [thread:$0]  %s165, 128, %s2, [#allocation5]
    $region29: #{tpu_custom_call.1} parent=1 // pred_fallthru
      _
    // Predicated region
    $region30: #{tpu_custom_call.1} parent=1 // pred_check
      _
    $region31: #{tpu_custom_call.1} parent=1 // pred_check_branch
      %169 = sbr.rel (0) target = $region33
    $region32: #{tpu_custom_call.1} parent=1 // pred_region
      %170 = dma.done [#allocation5], 128
    $region33: #{tpu_custom_call.1} parent=1 // pred_fallthru
      _
    %171 = vsyncpa [#allocation4], 1
    %172 = vsyncpa [#allocation7], 1
    %173 = vsyncpa [#allocation5], 1

</llo_original>
